<compile_context>
chip_gen: v5e
topology: v5e:2x2
jax: 0.10.0
libtpu: 0.0.40
codegen_flags: <defaults>
</compile_context>

<pallas_src>
import functools
import math

import jax
import jax.numpy as jnp
from jax.experimental import pallas as pl
from jax.experimental.pallas import tpu as pltpu

BN_EPS = 1e-5


def _round_up(v, m):
    return ((v + m - 1) // m) * m


def _pad_and_tile(dim, max_tile):
    """Pad `dim` to a multiple of 128 and pick the largest 128-multiple tile
    that divides the padded dim and does not exceed `max_tile`."""
    padded = _round_up(dim, 128)
    units = padded // 128
    best = 1
    for t in range(1, min(max_tile // 128, units) + 1):
        if units % t == 0:
            best = t
    return padded, best * 128


def _fc_bn_relu_kernel(*refs, residual: bool, use_bn: bool, bn_eps: float):
    """One (N-tile, K-tile) grid step of y = relu(BN(x @ W + b)) [+ x]."""
    if residual:
        (x_ref, w_ref, b_ref, g_ref, bt_ref, xres_ref, o_ref, acc_ref) = refs
    else:
        (x_ref, w_ref, b_ref, g_ref, bt_ref, o_ref, acc_ref) = refs
        xres_ref = None

    k = pl.program_id(1)

    @pl.when(k == 0)
    def _():
        if use_bn:
            # Linear bias is cancelled exactly by BN mean subtraction; skip it.
            acc_ref[...] = jnp.zeros_like(acc_ref)
        else:
            # Fold the bias into the accumulator init -> no epilogue add.
            acc_ref[...] = jnp.broadcast_to(b_ref[...], acc_ref.shape)

    # Partial matmul for this K tile; f32 accumulation on the MXU.
    acc_ref[...] += jnp.dot(x_ref[...], w_ref[...],
                            preferred_element_type=jnp.float32)

    @pl.when(k == pl.num_programs(1) - 1)
    def _():
        y = acc_ref[...]                                     # [M, TN] f32
        if use_bn:
            # Training-mode batch stats over the M rows (biased variance),
            # single pass: var = E[y^2] - mean^2, then fold gamma/beta/mean/
            # inv_std into a single scale/shift FMA.
            inv_m = jnp.float32(1.0 / y.shape[0])
            s1 = jnp.sum(y, axis=0, keepdims=True)           # [1, TN]
            s2 = jnp.sum(y * y, axis=0, keepdims=True)       # [1, TN]
            mean = s1 * inv_m
            var = s2 * inv_m - mean * mean
            inv_std = jax.lax.rsqrt(var + jnp.float32(bn_eps))
            scale = g_ref[...] * inv_std                     # [1, TN]
            shift = bt_ref[...] - mean * scale               # [1, TN]
            y = y * scale + shift
        y = jnp.maximum(y, jnp.float32(0.0))                 # ReLU
        if residual:
            y = y + xres_ref[...].astype(jnp.float32)
        o_ref[...] = y.astype(o_ref.dtype)


def fc_layer_forward(x, w, b, gamma, beta, *, use_bn=True,
                     compute_dtype=jnp.float32):
    """JAX/Pallas equivalent of FCLayer.forward.

    x: [..., k_in]
    w: [k_in, k_out]  (transpose of torch.nn.Linear weight)
    b, gamma, beta: [k_out]
    compute_dtype: dtype for X/W fed to the MXU (f32 default; bf16 halves HBM
                   traffic -- accumulation / BN stats stay f32 either way).
    """
    k_in = x.shape[-1]
    k_out = w.shape[1]
    residual = (k_in == k_out)
    lead = x.shape[:-1]
    m = math.prod(lead) if lead else 1

    # Padded dims + tile sizes (lane-dense, MXU friendly, VMEM safe).
    k_pad, tk = _pad_and_tile(k_in, 512)
    n_pad, tn = _pad_and_tile(k_out, 256)

    x2d = x.reshape(m, k_in).astype(compute_dtype)
    if k_pad != k_in:
        x2d = jnp.pad(x2d, ((0, 0), (0, k_pad - k_in)))

    w_p = w.astype(compute_dtype)
    w_p = jnp.pad(w_p, ((0, k_pad - k_in), (0, n_pad - k_out)))

    b_p = jnp.pad(b.astype(jnp.float32), (0, n_pad - k_out)).reshape(1, n_pad)
    g_p = jnp.pad(gamma.astype(jnp.float32), (0, n_pad - k_out),
                  constant_values=1.0).reshape(1, n_pad)
    bt_p = jnp.pad(beta.astype(jnp.float32),
                   (0, n_pad - k_out)).reshape(1, n_pad)

    grid = (n_pad // tn, k_pad // tk)

    in_specs = [
        pl.BlockSpec((m, tk), lambda j, k: (0, k)),     # X (matmul operand)
        pl.BlockSpec((tk, tn), lambda j, k: (k, j)),    # W
        pl.BlockSpec((1, tn), lambda j, k: (0, j)),     # bias
        pl.BlockSpec((1, tn), lambda j, k: (0, j)),     # gamma
        pl.BlockSpec((1, tn), lambda j, k: (0, j)),     # beta
    ]
    args = [x2d, w_p, b_p, g_p, bt_p]
    if residual:
        # Residual read, lane-aligned with the output N tile (k_pad == n_pad).
        in_specs.append(pl.BlockSpec((m, tn), lambda j, k: (0, j)))
        args.append(x2d)

    kernel = functools.partial(_fc_bn_relu_kernel,
                               residual=residual, use_bn=use_bn,
                               bn_eps=BN_EPS)

    out2d = pl.pallas_call(
        kernel,
        out_shape=jax.ShapeDtypeStruct((m, n_pad), jnp.float32),
        grid=grid,
        in_specs=in_specs,
        out_specs=pl.BlockSpec((m, tn), lambda j, k: (0, j)),
        scratch_shapes=[pltpu.VMEM((m, tn), jnp.float32)],
        compiler_params=pltpu.CompilerParams(
            dimension_semantics=("parallel", "arbitrary"),
            vmem_limit_bytes=48 * 1024 * 1024),
    )(*args)

    out2d = out2d[:, :k_out]
    return out2d.reshape(*lead, k_out)


def _reference_forward(x, w, b, gamma, beta, *, use_bn=True):
    """Plain-JAX reference mirroring the PyTorch module (training-mode BN)."""
    k_in = x.shape[-1]
    k_out = w.shape[1]
    lead = x.shape[:-1]
    x2d = x.reshape(-1, k_in)
    y = x2d @ w + b[None, :]
    if use_bn:
        mean = jnp.mean(y, axis=0, keepdims=True)
        var = jnp.mean((y - mean) ** 2, axis=0, keepdims=True)
        y = (y - mean) / jnp.sqrt(var + BN_EPS) * gamma[None, :] + beta[None, :]
    y = jnp.maximum(y, 0.0)
    if k_in == k_out:
        y = y + x2d
    return y.reshape(*lead, k_out)


if __name__ == "__main__":
    batch, seq, k_in = 2, 8, 32

    key = jax.random.PRNGKey(0)
    kx, kw, kb, kw2, kb2 = jax.random.split(key, 5)

    x = jax.random.normal(kx, (batch, seq, k_in), dtype=jnp.float32)
    bound = 1.0 / (k_in ** 0.5)

    # Case 1: k_out == k_in -> residual branch active (module default).
    k_out = k_in
    w = jax.random.uniform(kw, (k_in, k_out), jnp.float32, -bound, bound)
    b = jax.random.uniform(kb, (k_out,), jnp.float32, -bound, bound)
    gamma = jnp.ones((k_out,), jnp.float32)
    beta = jnp.zeros((k_out,), jnp.float32)

    out = fc_layer_forward(x, w, b, gamma, beta, use_bn=True)
    out = jax.block_until_ready(out)
    ref = _reference_forward(x, w, b, gamma, beta, use_bn=True)
    assert out.shape == (batch, seq, k_out)
    assert jnp.allclose(out, ref, atol=1e-4, rtol=1e-4), "mismatch (residual)"

    # Case 2: k_out != k_in -> no residual.
    k_out2 = 64
    w2 = jax.random.uniform(kw2, (k_in, k_out2), jnp.float32, -bound, bound)
    b2 = jax.random.uniform(kb2, (k_out2,), jnp.float32, -bound, bound)
    gamma2 = jnp.ones((k_out2,), jnp.float32)
    beta2 = jnp.zeros((k_out2,), jnp.float32)

    out2 = fc_layer_forward(x, w2, b2, gamma2, beta2, use_bn=True)
    out2 = jax.block_until_ready(out2)
    ref2 = _reference_forward(x, w2, b2, gamma2, beta2, use_bn=True)
    assert out2.shape == (batch, seq, k_out2)
    assert jnp.allclose(out2, ref2, atol=1e-4, rtol=1e-4), "mismatch (no residual)"

    # Case 3: use_bn=False (bias folded into accumulator init path).
    out3 = fc_layer_forward(x, w, b, gamma, beta, use_bn=False)
    out3 = jax.block_until_ready(out3)
    ref3 = _reference_forward(x, w, b, gamma, beta, use_bn=False)
    assert jnp.allclose(out3, ref3, atol=1e-4, rtol=1e-4), "mismatch (no BN)"

    print("KERNEL_OK")
</pallas_src>

<mosaic_0001>
module attributes {stable_mosaic.version = 11 : i64} {
  func.func @_fc_bn_relu_kernel(%arg0: i32, %arg1: i32, %arg2: memref<16x128xf32, #tpu.memory_space<vmem>>, %arg3: memref<128x128xf32, #tpu.memory_space<vmem>>, %arg4: memref<1x128xf32, #tpu.memory_space<vmem>>, %arg5: memref<1x128xf32, #tpu.memory_space<vmem>>, %arg6: memref<1x128xf32, #tpu.memory_space<vmem>>, %arg7: memref<16x128xf32, #tpu.memory_space<vmem>>, %arg8: memref<16x128xf32, #tpu.memory_space<vmem>>, %arg9: memref<16x128xf32, #tpu.memory_space<vmem>>) attributes {dimension_semantics = [#tpu.dimension_semantics<parallel>, #tpu.dimension_semantics<arbitrary>], iteration_bounds = array<i64: 1, 1>, scalar_prefetch = 0 : i64, scratch_operands = 1 : i64, tpu.core_type = #tpu.core_type<tc>, window_params = [{transform_indices = @transform_0, window_bounds = array<i64: 16, 128>}, {transform_indices = @transform_1, window_bounds = array<i64: 128, 128>}, {transform_indices = @transform_2, window_bounds = array<i64: 1, 128>}, {transform_indices = @transform_3, window_bounds = array<i64: 1, 128>}, {transform_indices = @transform_4, window_bounds = array<i64: 1, 128>}, {transform_indices = @transform_5, window_bounds = array<i64: 16, 128>}, {transform_indices = @transform_6, window_bounds = array<i64: 16, 128>}]} {
    %c0_i32 = arith.constant 0 : i32
    %0 = arith.cmpi eq, %arg1, %c0_i32 : i32
    %1 = arith.extui %0 : i1 to i32
    %c0_i32_0 = arith.constant 0 : i32
    %2 = arith.cmpi ne, %1, %c0_i32_0 : i32
    scf.if %2 {
      %cst_10 = arith.constant 0.000000e+00 : f32
      %12 = vector.broadcast %cst_10 : f32 to vector<16x128xf32>
      %c0_11 = arith.constant 0 : index
      %c0_12 = arith.constant 0 : index
      %13 = vector.load %arg9[%c0_11, %c0_12] : memref<16x128xf32, #tpu.memory_space<vmem>>, vector<16x128xf32>
      tpu.vector_store %arg9[%c0_11, %c0_12], %12 {strides = array<i32>} : memref<16x128xf32, #tpu.memory_space<vmem>>, vector<16x128xf32>,
    } else {
    }
    %c0 = arith.constant 0 : index
    %c0_1 = arith.constant 0 : index
    %3 = vector.load %arg9[%c0, %c0_1] : memref<16x128xf32, #tpu.memory_space<vmem>>, vector<16x128xf32>
    %c0_2 = arith.constant 0 : index
    %c0_3 = arith.constant 0 : index
    %4 = vector.load %arg2[%c0_2, %c0_3] : memref<16x128xf32, #tpu.memory_space<vmem>>, vector<16x128xf32>
    %c0_4 = arith.constant 0 : index
    %c0_5 = arith.constant 0 : index
    %5 = vector.load %arg3[%c0_4, %c0_5] : memref<128x128xf32, #tpu.memory_space<vmem>>, vector<128x128xf32>
    %cst = arith.constant dense<0.000000e+00> : vector<16x128xf32>
    %6 = tpu.matmul %4, %5, %cst {dimension_numbers = #tpu.dot_dimension_numbers<[1], [0], [0], [1], [0, 0, 1, 1], [], []>} : vector<16x128xf32>, vector<128x128xf32>, vector<16x128xf32> -> vector<16x128xf32>
    %7 = arith.addf %3, %6 : vector<16x128xf32>
    %c0_6 = arith.constant 0 : index
    %c0_7 = arith.constant 0 : index
    %8 = vector.load %arg9[%c0_6, %c0_7] : memref<16x128xf32, #tpu.memory_space<vmem>>, vector<16x128xf32>
    tpu.vector_store %arg9[%c0_6, %c0_7], %7 {strides = array<i32>} : memref<16x128xf32, #tpu.memory_space<vmem>>, vector<16x128xf32>,
    %c0_i32_8 = arith.constant 0 : i32
    %9 = arith.cmpi eq, %arg1, %c0_i32_8 : i32
    %10 = arith.extui %9 : i1 to i32
    %c0_i32_9 = arith.constant 0 : i32
    %11 = arith.cmpi ne, %10, %c0_i32_9 : i32
    scf.if %11 {
      %c0_10 = arith.constant 0 : index
      %c0_11 = arith.constant 0 : index
      %12 = vector.load %arg9[%c0_10, %c0_11] : memref<16x128xf32, #tpu.memory_space<vmem>>, vector<16x128xf32>
      %cst_12 = arith.constant dense<0.000000e+00> : vector<128xf32>
      %13 = vector.multi_reduction <add>, %12, %cst_12 [0] : vector<16x128xf32> to vector<128xf32>
      %14 = vector.shape_cast %13 : vector<128xf32> to vector<1x128xf32>
      %15 = arith.mulf %12, %12 : vector<16x128xf32>
      %cst_13 = arith.constant dense<0.000000e+00> : vector<128xf32>
      %16 = vector.multi_reduction <add>, %15, %cst_13 [0] : vector<16x128xf32> to vector<128xf32>
      %17 = vector.shape_cast %16 : vector<128xf32> to vector<1x128xf32>
      %cst_14 = arith.constant 6.250000e-02 : f32
      %18 = vector.broadcast %cst_14 : f32 to vector<1x128xf32>
      %19 = arith.mulf %14, %18 : vector<1x128xf32>
      %cst_15 = arith.constant 6.250000e-02 : f32
      %20 = vector.broadcast %cst_15 : f32 to vector<1x128xf32>
      %21 = arith.mulf %17, %20 : vector<1x128xf32>
      %22 = arith.mulf %19, %19 : vector<1x128xf32>
      %23 = arith.subf %21, %22 : vector<1x128xf32>
      %cst_16 = arith.constant 9.99999974E-6 : f32
      %24 = vector.broadcast %cst_16 : f32 to vector<1x128xf32>
      %25 = arith.addf %23, %24 : vector<1x128xf32>
      %26 = math.rsqrt %25 : vector<1x128xf32>
      %c0_17 = arith.constant 0 : index
      %c0_18 = arith.constant 0 : index
      %27 = vector.load %arg5[%c0_17, %c0_18] : memref<1x128xf32, #tpu.memory_space<vmem>>, vector<1x128xf32>
      %28 = arith.mulf %27, %26 : vector<1x128xf32>
      %c0_19 = arith.constant 0 : index
      %c0_20 = arith.constant 0 : index
      %29 = vector.load %arg6[%c0_19, %c0_20] : memref<1x128xf32, #tpu.memory_space<vmem>>, vector<1x128xf32>
      %30 = arith.mulf %19, %28 : vector<1x128xf32>
      %31 = arith.subf %29, %30 : vector<1x128xf32>
      %32 = vector.broadcast %28 : vector<1x128xf32> to vector<16x128xf32>
      %33 = arith.mulf %12, %32 : vector<16x128xf32>
      %34 = vector.broadcast %31 : vector<1x128xf32> to vector<16x128xf32>
      %35 = arith.addf %33, %34 : vector<16x128xf32>
      %cst_21 = arith.constant 0.000000e+00 : f32
      %36 = vector.broadcast %cst_21 : f32 to vector<16x128xf32>
      %37 = arith.maximumf %35, %36 : vector<16x128xf32>
      %c0_22 = arith.constant 0 : index
      %c0_23 = arith.constant 0 : index
      %38 = vector.load %arg7[%c0_22, %c0_23] : memref<16x128xf32, #tpu.memory_space<vmem>>, vector<16x128xf32>
      %39 = arith.addf %37, %38 : vector<16x128xf32>
      %c0_24 = arith.constant 0 : index
      %c0_25 = arith.constant 0 : index
      %40 = vector.load %arg8[%c0_24, %c0_25] : memref<16x128xf32, #tpu.memory_space<vmem>>, vector<16x128xf32>
      tpu.vector_store %arg8[%c0_24, %c0_25], %39 {strides = array<i32>} : memref<16x128xf32, #tpu.memory_space<vmem>>, vector<16x128xf32>,
    } else {
    }
    return
  }
  func.func @transform_0(%arg0: i32, %arg1: i32) -> (i32, i32) {
    %c0_i32 = arith.constant 0 : i32
    %c0_i32_0 = arith.constant 0 : i32
    return %c0_i32, %arg1 : i32, i32
  }
  func.func @transform_1(%arg0: i32, %arg1: i32) -> (i32, i32) {
    %c0_i32 = arith.constant 0 : i32
    return %arg1, %arg0 : i32, i32
  }
  func.func @transform_2(%arg0: i32, %arg1: i32) -> (i32, i32) {
    %c0_i32 = arith.constant 0 : i32
    %c0_i32_0 = arith.constant 0 : i32
    return %c0_i32, %arg0 : i32, i32
  }
  func.func @transform_3(%arg0: i32, %arg1: i32) -> (i32, i32) {
    %c0_i32 = arith.constant 0 : i32
    %c0_i32_0 = arith.constant 0 : i32
    return %c0_i32, %arg0 : i32, i32
  }
  func.func @transform_4(%arg0: i32, %arg1: i32) -> (i32, i32) {
    %c0_i32 = arith.constant 0 : i32
    %c0_i32_0 = arith.constant 0 : i32
    return %c0_i32, %arg0 : i32, i32
  }
  func.func @transform_5(%arg0: i32, %arg1: i32) -> (i32, i32) {
    %c0_i32 = arith.constant 0 : i32
    %c0_i32_0 = arith.constant 0 : i32
    return %c0_i32, %arg0 : i32, i32
  }
  func.func @transform_6(%arg0: i32, %arg1: i32) -> (i32, i32) {
    %c0_i32 = arith.constant 0 : i32
    %c0_i32_0 = arith.constant 0 : i32
    return %c0_i32, %arg0 : i32, i32
  }
}

</mosaic_0001>

<llo_original>
// kernel: tpu_custom_call.1
$region0: #{tpu_custom_call.1}
  #allocation0 [shape = 'u32[]', space=smem, size = 0x4, offset = 0x4, fixed_abs, tag = 'smem constant byte address 0x4 - core index']
  #allocation1 [shape = 'u32[72,128]{1,0:T(1,128)}', space=vmem, size = 0x9000, scoped, tag = 'internal scratch']
  #allocation2 [shape = 'f32[16,128]{1,0:T(8,128)}', space=vmem, size = 0x2000, scoped, tag = 'scratch operand']
  %s0 = inlined_call_operand.hbm [shape: f32[16,128], index: 0, kind: input, shape index: {}]
  %s1 = inlined_call_operand.hbm [shape: f32[128,128], index: 1, kind: input, shape index: {}]
  %s2 = inlined_call_operand.vmem [shape: f32[1,128], index: 2, kind: input, shape index: {}]
  %s3 = inlined_call_operand.vmem [shape: f32[1,128], index: 3, kind: input, shape index: {}]
  %s4 = inlined_call_operand.vmem [shape: f32[1,128], index: 4, kind: input, shape index: {}]
  %s5 = inlined_call_operand.hbm [shape: f32[16,128], index: 5, kind: input, shape index: {}]
  %s6 = inlined_call_operand.hbm [shape: f32[16,128], index: 6, kind: output, shape index: {}]
  %s7 = sld [smem:[#allocation0]]
  $region54: #{tpu_custom_call.1} parent=0
    _
  %s9 = ssub.s32 1, %s7
  %s10 = scalar_select 0, %s9, %s7
  $region1: #{tpu_custom_call.1} parent=0
    #allocation3 [shape = 'u8[8192]{0}', space=vmem, size = 0x2000, scoped, tag = 'input window, operand 0, single buffered']
    #allocation4 [shape = 's32[1]{0}', space=sflag, size = 0x4, scoped, tag = 'scoped memory for tpu_custom_call.1']
    #allocation5 [shape = 's32[1]{0}', space=sflag, size = 0x4, scoped, tag = 'scoped memory for tpu_custom_call.1']
    #allocation6 [shape = 'u8[65536]{0}', space=vmem, size = 0x10000, scoped, tag = 'input window, operand 1, single buffered']
    #allocation7 [shape = 's32[1]{0}', space=sflag, size = 0x4, scoped, tag = 'scoped memory for tpu_custom_call.1']
    #allocation8 [shape = 'u8[8192]{0}', space=vmem, size = 0x2000, scoped, tag = 'input window, operand 5, single buffered']
    #allocation9 [shape = 'u8[8192]{0}', space=vmem, size = 0x2000, scoped, tag = 'output window, operand 0, single buffered']
    %11 = vsyncpa [#allocation4], 0
    %12 = vsyncpa [#allocation7], 0
    %13 = vsyncpa [#allocation5], 0
    // Predicated region
    $region2: #{tpu_custom_call.1} parent=1 // pred_check
      _
    $region3: #{tpu_custom_call.1} parent=1 // pred_check_branch
      %15 = sbr.rel (0) target = $region5
    $region4: #{tpu_custom_call.1} parent=1 // pred_region
      %17 = vsyncadd [#allocation4], 0
      %s18 = sshll.u32 %s0, 4
      %s19 = int_to_ptr.hbm [resolvable:$true] %s18
      %s20 = sshll.u32 [#allocation3], 4
      %s21 = int_to_ptr.vmem [resolvable:$true] %s20
      %26 = dma.hbm_to_vmem [thread:$0]  %s19, 256, %s21, [#allocation4], 128, 128, 8
    $region5: #{tpu_custom_call.1} parent=1 // pred_fallthru
      _
    // Predicated region
    $region6: #{tpu_custom_call.1} parent=1 // pred_check
      _
    $region7: #{tpu_custom_call.1} parent=1 // pred_check_branch
      %28 = sbr.rel (0) target = $region9
    $region8: #{tpu_custom_call.1} parent=1 // pred_region
      %30 = vsyncadd [#allocation7], 0
      %s31 = sshll.u32 %s1, 4
      %s32 = int_to_ptr.hbm [resolvable:$true] %s31
      %s33 = sshll.u32 [#allocation6], 4
      %s34 = int_to_ptr.vmem [resolvable:$true] %s33
      %39 = dma.hbm_to_vmem [thread:$0]  %s32, 2048, %s34, [#allocation7], 128, 128, 8
    $region9: #{tpu_custom_call.1} parent=1 // pred_fallthru
      _
    // Predicated region
    $region10: #{tpu_custom_call.1} parent=1 // pred_check
      _
    $region11: #{tpu_custom_call.1} parent=1 // pred_check_branch
      %41 = sbr.rel (0) target = $region13
    $region12: #{tpu_custom_call.1} parent=1 // pred_region
      _
    $region13: #{tpu_custom_call.1} parent=1 // pred_fallthru
      _
    // Predicated region
    $region14: #{tpu_custom_call.1} parent=1 // pred_check
      _
    $region15: #{tpu_custom_call.1} parent=1 // pred_check_branch
      %43 = sbr.rel (0) target = $region17
    $region16: #{tpu_custom_call.1} parent=1 // pred_region
      _
    $region17: #{tpu_custom_call.1} parent=1 // pred_fallthru
      _
    // Predicated region
    $region18: #{tpu_custom_call.1} parent=1 // pred_check
      _
    $region19: #{tpu_custom_call.1} parent=1 // pred_check_branch
      %45 = sbr.rel (0) target = $region21
    $region20: #{tpu_custom_call.1} parent=1 // pred_region
      _
    $region21: #{tpu_custom_call.1} parent=1 // pred_fallthru
      _
    // Predicated region
    $region22: #{tpu_custom_call.1} parent=1 // pred_check
      _
    $region23: #{tpu_custom_call.1} parent=1 // pred_check_branch
      %47 = sbr.rel (0) target = $region25
    $region24: #{tpu_custom_call.1} parent=1 // pred_region
      %49 = vsyncadd [#allocation7], 0
      %s50 = sshll.u32 %s5, 4
      %s51 = int_to_ptr.hbm [resolvable:$true] %s50
      %s52 = sshll.u32 [#allocation8], 4
      %s53 = int_to_ptr.vmem [resolvable:$true] %s52
      %58 = dma.hbm_to_vmem [thread:$0]  %s51, 256, %s53, [#allocation7], 128, 128, 8
    $region25: #{tpu_custom_call.1} parent=1 // pred_fallthru
      _
    // Predicated region
    $region26: #{tpu_custom_call.1} parent=1 // pred_check
      _
    $region27: #{tpu_custom_call.1} parent=1 // pred_check_branch
      %60 = sbr.rel (0) target = $region29
    $region28: #{tpu_custom_call.1} parent=1 // pred_region
      %62 = dma.done [#allocation4], 256
    $region29: #{tpu_custom_call.1} parent=1 // pred_fallthru
      _
    // Predicated region
    $region30: #{tpu_custom_call.1} parent=1 // pred_check
      _
    $region31: #{tpu_custom_call.1} parent=1 // pred_check_branch
      %64 = sbr.rel (0) target = $region33
    $region32: #{tpu_custom_call.1} parent=1 // pred_region
      %66 = dma.done [#allocation7], 2048
    $region33: #{tpu_custom_call.1} parent=1 // pred_fallthru
      _
    // Predicated region
    $region34: #{tpu_custom_call.1} parent=1 // pred_check
      _
    $region35: #{tpu_custom_call.1} parent=1 // pred_check_branch
      %68 = sbr.rel (0) target = $region37
    $region36: #{tpu_custom_call.1} parent=1 // pred_region
      %70 = dma.done [#allocation7], 256
    $region37: #{tpu_custom_call.1} parent=1 // pred_fallthru
      _
    %p71 = scmp.eq.s32.totalorder 0, 0
    // Predicated region
    $region38: #{tpu_custom_call.1} parent=1 // pred_check
      %p72 = pneg %p71
    $region39: #{tpu_custom_call.1} parent=1 // pred_check_branch
      %74 = sbr.rel (%p72) target = $region41
    $region40: #{tpu_custom_call.1} parent=1 // pred_region
      %75 = vst [vmem:[#allocation2] sm:$0xff] 0.0
      %76 = vst [vmem:[#allocation2 + $0x8] sm:$0xff] 0.0
    $region41: #{tpu_custom_call.1} parent=1 // pred_fallthru
      _
    %v77 = vld [vmem:[#allocation2] sm:$0xff]
    %v78 = vld [vmem:[#allocation2 + $0x8] sm:$0xff]
    %v79 = vld [vmem:[#allocation3] sm:$0xff]
    %v80 = vld [vmem:[#allocation3 + $0x8] sm:$0xff]
    %v81 = vld [vmem:[#allocation6] sm:$0xff]
    %v82 = vld [vmem:[#allocation6 + $0x8] sm:$0xff]
    %v83 = vld [vmem:[#allocation6 + $0x10] sm:$0xff]
    %v84 = vld [vmem:[#allocation6 + $0x18] sm:$0xff]
    %v85 = vld [vmem:[#allocation6 + $0x20] sm:$0xff]
    %v86 = vld [vmem:[#allocation6 + $0x28] sm:$0xff]
    %v87 = vld [vmem:[#allocation6 + $0x30] sm:$0xff]
    %v88 = vld [vmem:[#allocation6 + $0x38] sm:$0xff]
    %v89 = vld [vmem:[#allocation6 + $0x40] sm:$0xff]
    %v90 = vld [vmem:[#allocation6 + $0x48] sm:$0xff]
    %v91 = vld [vmem:[#allocation6 + $0x50] sm:$0xff]
    %v92 = vld [vmem:[#allocation6 + $0x58] sm:$0xff]
    %v93 = vld [vmem:[#allocation6 + $0x60] sm:$0xff]
    %v94 = vld [vmem:[#allocation6 + $0x68] sm:$0xff]
    %v95 = vld [vmem:[#allocation6 + $0x70] sm:$0xff]
    %v96 = vld [vmem:[#allocation6 + $0x78] sm:$0xff]
    %97 = vmatpush.msra.mxu0 %v96
    %98 = vmatpush.msra.mxu0 %v95
    %99 = vmatpush.msra.mxu0 %v94
    %100 = vmatpush.msra.mxu0 %v93
    %101 = vmatpush.msra.mxu0 %v92
    %102 = vmatpush.msra.mxu0 %v91
    %103 = vmatpush.msra.mxu0 %v90
    %104 = vmatpush.msra.mxu0 %v89
    %105 = vmatpush.msra.mxu0 %v88
    %106 = vmatpush.msra.mxu0 %v87
    %107 = vmatpush.msra.mxu0 %v86
    %108 = vmatpush.msra.mxu0 %v85
    %109 = vmatpush.msra.mxu0 %v84
    %110 = vmatpush.msra.mxu0 %v83
    %111 = vmatpush.msra.mxu0 %v82
    %112 = vmatpush.msra.mxu0 %v81
    %113 = vmatmul.f32.gmra.mxu0 %v79
    %v114 = vpop.f32.mrf.mxu0
    %v115 = vadd.f32 0.0, %v114
    %116 = vmatmul.f32.gmra.mxu0 %v80
    %v117 = vpop.f32.mrf.mxu0
    %v118 = vadd.f32 0.0, %v117
    %119 = vdwg.mxu0
    %v120 = vadd.f32 %v77, %v115
    %v121 = vadd.f32 %v78, %v118
    %122 = vst [vmem:[#allocation2] sm:$0xff] %v120
    %123 = vst [vmem:[#allocation2 + $0x8] sm:$0xff] %v121
    // Predicated region
    $region42: #{tpu_custom_call.1} parent=1 // pred_check
      %p124 = pneg %p71
    $region43: #{tpu_custom_call.1} parent=1 // pred_check_branch
      %126 = sbr.rel (%p124) target = $region45
    $region44: #{tpu_custom_call.1} parent=1 // pred_region
      %v127 = vld [vmem:[#allocation2] sm:$0xff]
      %v128 = vld [vmem:[#allocation2 + $0x8] sm:$0xff]
      %v129 = vadd.f32 %v127, %v128
      %v130 = vrot.slane %v129, 4
      %v131 = vadd.f32 %v129, %v130
      %v132 = vrot.slane %v131, 2
      %v133 = vadd.f32 %v131, %v132
      %v134 = vrot.slane %v133, 1
      %v135 = vadd.f32 %v133, %v134
      %v136 = vmul.f32 %v127, %v127
      %v137 = vmul.f32 %v128, %v128
      %v138 = vadd.f32 %v136, %v137
      %v139 = vrot.slane %v138, 4
      %v140 = vadd.f32 %v138, %v139
      %v141 = vrot.slane %v140, 2
      %v142 = vadd.f32 %v140, %v141
      %v143 = vrot.slane %v142, 1
      %v144 = vadd.f32 %v142, %v143
      %v145 = vmul.f32 %v135, 0.0625
      %v146 = vmul.f32 %v144, 0.0625
      %v147 = vmul.f32 %v145, %v145
      %v148 = vsub.f32 %v146, %v147
      %v149 = vadd.f32 %v148, 1e-05
      %v150 = vrsqrt.pop %v149
      %v151 = vmul.f32 %v150, %v149
      %v152 = vmul.f32 %v151, %v150
      %v153 = vmul.f32 0.5, %v152
      %v154 = vsub.f32 1.5, %v153
      %v155 = vmul.f32 %v150, %v154
      %vm156 = vweird.f32 %v149
      %vm157 = vweird.f32 %v150
      %vm158 = vmor %vm156, %vm157
      %v159 = vsel %vm158, %v150, %v155
      %v160 = vld [vmem:[%s3] sm:$0x1]
      %v161 = vmul.f32 %v160, %v159
      %v162 = vld [vmem:[%s4] sm:$0x1]
      %v163 = vmul.f32 %v145, %v161
      %v164 = vsub.f32 %v162, %v163
      %v166 = vperm.slane %v161, 0
      %v168 = vmul.f32 %v127, %v166
      %v169 = vmul.f32 %v128, %v166
      %v171 = vperm.slane %v164, 0
      %v173 = vadd.f32 %v168, %v171
      %v174 = vadd.f32 %v169, %v171
      %v175 = vmax.f32 %v173, 0.0
      %v176 = vmax.f32 %v174, 0.0
      %v177 = vld [vmem:[#allocation8] sm:$0xff]
      %v178 = vld [vmem:[#allocation8 + $0x8] sm:$0xff]
      %v179 = vadd.f32 %v175, %v177
      %v180 = vadd.f32 %v176, %v178
      %181 = vst [vmem:[#allocation9] sm:$0xff] %v179
      %182 = vst [vmem:[#allocation9 + $0x8] sm:$0xff] %v180
    $region45: #{tpu_custom_call.1} parent=1 // pred_fallthru
      _
    // Predicated region
    $region46: #{tpu_custom_call.1} parent=1 // pred_check
      _
    $region47: #{tpu_custom_call.1} parent=1 // pred_check_branch
      %184 = sbr.rel (0) target = $region49
    $region48: #{tpu_custom_call.1} parent=1 // pred_region
      %186 = vsyncadd [#allocation5], 0
      %s187 = sshll.u32 [#allocation9], 4
      %s188 = int_to_ptr.vmem [resolvable:$true] %s187
      %s189 = sshll.u32 %s6, 4
      %s190 = int_to_ptr.hbm [resolvable:$true] %s189
      %195 = dma.vmem_to_hbm [thread:$0]  %s188, 256, %s190, [#allocation5], 128, 128, 8
    $region49: #{tpu_custom_call.1} parent=1 // pred_fallthru
      _
    // Predicated region
    $region50: #{tpu_custom_call.1} parent=1 // pred_check
      _
    $region51: #{tpu_custom_call.1} parent=1 // pred_check_branch
      %197 = sbr.rel (0) target = $region53
    $region52: #{tpu_custom_call.1} parent=1 // pred_region
      %199 = dma.done [#allocation5], 256
    $region53: #{tpu_custom_call.1} parent=1 // pred_fallthru
      _
    %200 = vsyncpa [#allocation4], 1
    %201 = vsyncpa [#allocation7], 1
    %202 = vsyncpa [#allocation5], 1

</llo_original>
